<compile_context>
chip_gen: v5e
topology: v5e:2x2
jax: 0.10.0
libtpu: 0.0.40
codegen_flags: <defaults>
</compile_context>

<pallas_src>
import functools
import math

import jax
import jax.numpy as jnp
from jax import lax
from jax.experimental import pallas as pl
from jax.experimental.pallas import tpu as pltpu


def _pe_add_kernel(x_ref, o_ref, *, d_model, tb, tn):
    """One (tb, tn) block of the flattened (B, S*D) view."""
    b0 = pl.program_id(0) * tb          # first global batch row of this block
    n0 = pl.program_id(1) * tn          # first global flattened column

    # "Position" in the reference module is the *batch* index (see header).
    # Sublane vector (tb, 1): the position of each row in this block.
    pos = (b0 + lax.broadcasted_iota(jnp.int32, (tb, 1), 0)).astype(jnp.float32)

    # Lane vectors (1, tn): embedding dim of each flattened column and the
    # derived quantities.  exp() runs over only tn elements, not tb*tn.
    col = n0 + lax.broadcasted_iota(jnp.int32, (1, tn), 1)
    d_idx = col % d_model
    # 1 / 10000**(2d/D) == exp(-(2d/D) * ln(10000))   (one EUP exp per lane)
    inv_denom = jnp.exp(d_idx.astype(jnp.float32) *
                        (-2.0 * math.log(10000.0) / float(d_model)))
    # even d -> sin(angle); odd d -> cos(angle) == sin(angle + pi/2).
    phase = (d_idx % 2).astype(jnp.float32) * (math.pi / 2.0)

    # Outer-product broadcast; single full-block transcendental (sin).
    pe = jnp.sin(pos * inv_denom + phase)

    o_ref[...] = x_ref[...] + pe.astype(x_ref.dtype)


def _choose_tiles(B, N, elem_bytes, target_bytes):
    """Pick a (tb, tn) block for a (B, N) array.

    Keeps each block <= ~target_bytes (input + output, each double-buffered,
    is then 4x that -- comfortably inside scoped VMEM on v5e/v6e/v7x) and
    keeps the lane (last) block dim a multiple of 128 -- or the full dim --
    so stores are unmasked.
    """
    tb = B if B <= 8 else 8                       # sublane quantum when tiling B
    budget_cols = max(128, target_bytes // (tb * elem_bytes))
    if N <= budget_cols:
        tn = N                                    # full, lane-dense row
        rows = max(1, target_bytes // max(1, tn * elem_bytes))
        if rows >= B:
            tb = B                                # whole problem in few blocks
        elif rows >= 8:
            tb = min(B, (rows // 8) * 8)
    else:
        tn = (budget_cols // 128) * 128           # multiple of 128 -> unmasked vst
    return tb, tn


def positional_encoding(x, *, target_block_bytes=2 << 20):
    """x: (B, S, D) -> (B, S, D) with the module's positional info added."""
    B, S, D = x.shape
    N = S * D
    # Lane-dense view: last dim becomes S*D instead of (possibly tiny) D.
    x2 = x.reshape(B, N)
    tb, tn = _choose_tiles(B, N, x.dtype.itemsize, target_block_bytes)
    grid = (pl.cdiv(B, tb), pl.cdiv(N, tn))

    kernel = functools.partial(_pe_add_kernel, d_model=D, tb=tb, tn=tn)
    out2 = pl.pallas_call(
        kernel,
        out_shape=jax.ShapeDtypeStruct((B, N), x.dtype),
        grid_spec=pltpu.PrefetchScalarGridSpec(
            num_scalar_prefetch=0,
            grid=grid,
            in_specs=[pl.BlockSpec((tb, tn), lambda b, n: (b, n))],
            out_specs=pl.BlockSpec((tb, tn), lambda b, n: (b, n)),
        ),
        compiler_params=pltpu.CompilerParams(
            dimension_semantics=("parallel", "parallel"),
            vmem_limit_bytes=32 << 20,
        ),
    )(x2)
    return out2.reshape(B, S, D)


def _reference(x):
    """Pure-JAX mirror of the PyTorch buffer construction + forward."""
    B, S, D = x.shape
    pos = jnp.arange(B, dtype=jnp.float32).reshape(-1, 1)
    denom = jnp.power(10000.0, jnp.arange(D, dtype=jnp.float32) * 2.0 / D)
    angles = pos / denom                               # (B, D)
    pe = jnp.where(jnp.arange(D) % 2 == 0, jnp.sin(angles), jnp.cos(angles))
    return x + pe[:, None, :]                          # broadcast over seq_len


def _check(B, S, D, key, **kw):
    x = jax.random.normal(key, (B, S, D), dtype=jnp.float32)
    out = jax.block_until_ready(positional_encoding(x, **kw))
    ref = _reference(x)
    assert out.shape == x.shape and out.dtype == x.dtype
    assert jnp.allclose(out, ref, atol=2e-5, rtol=1e-5), (
        f"mismatch vs reference for shape {(B, S, D)}")


if __name__ == "__main__":
    key = jax.random.PRNGKey(0)
    k0, k1, k2 = jax.random.split(key, 3)

    # Small shape consistent with the module: (batch, seq_len, d_model).
    _check(2, 8, 32, k0)
    # Exercise the column-tiled path (d_model=512 like the module default).
    _check(4, 16, 512, k1, target_block_bytes=16 << 10)
    # Exercise the batch-tiled path (tb < B; pos offset by program_id(0)*tb).
    _check(16, 8, 128, k2, target_block_bytes=4 << 10)

    print("KERNEL_OK")
</pallas_src>

<mosaic_0001>
module attributes {stable_mosaic.version = 11 : i64} {
  func.func @_pe_add_kernel(%arg0: i32, %arg1: i32, %arg2: memref<2x256xf32, #tpu.memory_space<vmem>>, %arg3: memref<2x256xf32, #tpu.memory_space<vmem>>) attributes {dimension_semantics = [#tpu.dimension_semantics<parallel>, #tpu.dimension_semantics<parallel>], iteration_bounds = array<i64: 1, 1>, scalar_prefetch = 0 : i64, scratch_operands = 0 : i64, tpu.core_type = #tpu.core_type<tc>, window_params = [{transform_indices = @transform_0, window_bounds = array<i64: 2, 256>}, {transform_indices = @transform_1, window_bounds = array<i64: 2, 256>}]} {
    %c2_i32 = arith.constant 2 : i32
    %0 = arith.muli %arg0, %c2_i32 : i32
    %c256_i32 = arith.constant 256 : i32
    %1 = arith.muli %arg1, %c256_i32 : i32
    %2 = tpu.iota {dimensions = array<i32: 0>} : vector<2x1xi32>
    %3 = vector.broadcast %0 : i32 to vector<2x1xi32>
    %4 = arith.addi %3, %2 : vector<2x1xi32>
    %5 = arith.sitofp %4 : vector<2x1xi32> to vector<2x1xf32>
    %6 = tpu.iota {dimensions = array<i32: 1>} : vector<1x256xi32>
    %7 = vector.broadcast %1 : i32 to vector<1x256xi32>
    %8 = arith.addi %7, %6 : vector<1x256xi32>
    %c32_i32 = arith.constant 32 : i32
    %c0_i32 = arith.constant 0 : i32
    %9 = arith.cmpi eq, %c32_i32, %c0_i32 : i32
    %c1_i32 = arith.constant 1 : i32
    %10 = arith.select %9, %c1_i32, %c32_i32 : i32
    %11 = vector.broadcast %10 : i32 to vector<1x256xi32>
    %12 = arith.remsi %8, %11 : vector<1x256xi32>
    %c0_i32_0 = arith.constant 0 : i32
    %13 = vector.broadcast %c0_i32_0 : i32 to vector<1x256xi32>
    %14 = arith.cmpi ne, %12, %13 : vector<1x256xi32>
    %c0_i32_1 = arith.constant 0 : i32
    %15 = vector.broadcast %c0_i32_1 : i32 to vector<1x256xi32>
    %16 = arith.cmpi slt, %12, %15 : vector<1x256xi32>
    %c0_i32_2 = arith.constant 0 : i32
    %17 = arith.cmpi slt, %10, %c0_i32_2 : i32
    %18 = vector.broadcast %17 : i1 to vector<1x256xi1>
    %19 = vector.broadcast %18 : vector<1x256xi1> to vector<1x256xi1>
    %20 = arith.xori %16, %19 : vector<1x256xi1>
    %21 = arith.andi %20, %14 : vector<1x256xi1>
    %22 = vector.broadcast %10 : i32 to vector<1x256xi32>
    %23 = arith.addi %12, %22 : vector<1x256xi32>
    %24 = arith.select %21, %23, %12 : vector<1x256xi1>, vector<1x256xi32>
    %25 = arith.sitofp %24 : vector<1x256xi32> to vector<1x256xf32>
    %cst = arith.constant -0.575646281 : f32
    %26 = vector.broadcast %cst : f32 to vector<1x256xf32>
    %27 = arith.mulf %25, %26 : vector<1x256xf32>
    %28 = math.exp %27 : vector<1x256xf32>
    %c2_i32_3 = arith.constant 2 : i32
    %c0_i32_4 = arith.constant 0 : i32
    %29 = arith.cmpi eq, %c2_i32_3, %c0_i32_4 : i32
    %c1_i32_5 = arith.constant 1 : i32
    %30 = arith.select %29, %c1_i32_5, %c2_i32_3 : i32
    %31 = vector.broadcast %30 : i32 to vector<1x256xi32>
    %32 = arith.remsi %24, %31 : vector<1x256xi32>
    %c0_i32_6 = arith.constant 0 : i32
    %33 = vector.broadcast %c0_i32_6 : i32 to vector<1x256xi32>
    %34 = arith.cmpi ne, %32, %33 : vector<1x256xi32>
    %c0_i32_7 = arith.constant 0 : i32
    %35 = vector.broadcast %c0_i32_7 : i32 to vector<1x256xi32>
    %36 = arith.cmpi slt, %32, %35 : vector<1x256xi32>
    %c0_i32_8 = arith.constant 0 : i32
    %37 = arith.cmpi slt, %30, %c0_i32_8 : i32
    %38 = vector.broadcast %37 : i1 to vector<1x256xi1>
    %39 = vector.broadcast %38 : vector<1x256xi1> to vector<1x256xi1>
    %40 = arith.xori %36, %39 : vector<1x256xi1>
    %41 = arith.andi %40, %34 : vector<1x256xi1>
    %42 = vector.broadcast %30 : i32 to vector<1x256xi32>
    %43 = arith.addi %32, %42 : vector<1x256xi32>
    %44 = arith.select %41, %43, %32 : vector<1x256xi1>, vector<1x256xi32>
    %45 = arith.sitofp %44 : vector<1x256xi32> to vector<1x256xf32>
    %cst_9 = arith.constant 1.57079637 : f32
    %46 = vector.broadcast %cst_9 : f32 to vector<1x256xf32>
    %47 = arith.mulf %45, %46 : vector<1x256xf32>
    %48 = vector.broadcast %5 : vector<2x1xf32> to vector<2x256xf32>
    %49 = vector.broadcast %28 : vector<1x256xf32> to vector<2x256xf32>
    %50 = arith.mulf %48, %49 : vector<2x256xf32>
    %51 = vector.broadcast %47 : vector<1x256xf32> to vector<2x256xf32>
    %52 = arith.addf %50, %51 : vector<2x256xf32>
    %53 = math.sin %52 : vector<2x256xf32>
    %c0 = arith.constant 0 : index
    %c0_10 = arith.constant 0 : index
    %54 = vector.load %arg2[%c0, %c0_10] : memref<2x256xf32, #tpu.memory_space<vmem>>, vector<2x256xf32>
    %55 = arith.addf %54, %53 : vector<2x256xf32>
    %c0_11 = arith.constant 0 : index
    %c0_12 = arith.constant 0 : index
    %56 = vector.load %arg3[%c0_11, %c0_12] : memref<2x256xf32, #tpu.memory_space<vmem>>, vector<2x256xf32>
    tpu.vector_store %arg3[%c0_11, %c0_12], %55 {strides = array<i32>} : memref<2x256xf32, #tpu.memory_space<vmem>>, vector<2x256xf32>,
    return
  }
  func.func @transform_0(%arg0: i32, %arg1: i32) -> (i32, i32) {
    %c0_i32 = arith.constant 0 : i32
    return %arg0, %arg1 : i32, i32
  }
  func.func @transform_1(%arg0: i32, %arg1: i32) -> (i32, i32) {
    %c0_i32 = arith.constant 0 : i32
    return %arg0, %arg1 : i32, i32
  }
}

</mosaic_0001>

<llo_original>
// kernel: tpu_custom_call.1
$region0: #{tpu_custom_call.1}
  #allocation0 [shape = 'u32[]', space=smem, size = 0x4, offset = 0x4, fixed_abs, tag = 'smem constant byte address 0x4 - core index']
  #allocation1 [shape = 'u32[72,128]{1,0:T(1,128)}', space=vmem, size = 0x9000, scoped, tag = 'internal scratch']
  %s0 = inlined_call_operand.hbm [shape: f32[2,256], index: 0, kind: input, shape index: {}]
  %s1 = inlined_call_operand.hbm [shape: f32[2,256], index: 1, kind: output, shape index: {}]
  %s2 = sld [smem:[#allocation0]]
  $region18: #{tpu_custom_call.1} parent=0
    _
  %s4 = ssub.s32 1, %s2
  %s5 = scalar_select 0, %s4, %s2
  $region1: #{tpu_custom_call.1} parent=0
    #allocation2 [shape = 'u8[2048]{0}', space=vmem, size = 0x800, scoped, tag = 'input window, operand 0, single buffered']
    #allocation3 [shape = 's32[1]{0}', space=sflag, size = 0x4, scoped, tag = 'scoped memory for tpu_custom_call.1']
    #allocation4 [shape = 's32[1]{0}', space=sflag, size = 0x4, scoped, tag = 'scoped memory for tpu_custom_call.1']
    #allocation5 [shape = 'u8[2048]{0}', space=vmem, size = 0x800, scoped, tag = 'output window, operand 0, single buffered']
    %6 = vsyncpa [#allocation3], 0
    %7 = vsyncpa [#allocation4], 0
    // Predicated region
    $region2: #{tpu_custom_call.1} parent=1 // pred_check
      _
    $region3: #{tpu_custom_call.1} parent=1 // pred_check_branch
      %9 = sbr.rel (0) target = $region5
    $region4: #{tpu_custom_call.1} parent=1 // pred_region
      %11 = vsyncadd [#allocation3], 0
      %s13 = sshll.u32 %s0, 4
      %s14 = int_to_ptr.hbm [resolvable:$true] %s13
      %s15 = sshll.u32 [#allocation2], 4
      %s16 = int_to_ptr.vmem [resolvable:$true] %s15
      %18 = dma.hbm_to_vmem [thread:$0]  %s14, 64, %s16, [#allocation3]
    $region5: #{tpu_custom_call.1} parent=1 // pred_fallthru
      _
    // Predicated region
    $region6: #{tpu_custom_call.1} parent=1 // pred_check
      _
    $region7: #{tpu_custom_call.1} parent=1 // pred_check_branch
      %20 = sbr.rel (0) target = $region9
    $region8: #{tpu_custom_call.1} parent=1 // pred_region
      %22 = dma.done [#allocation3], 64
    $region9: #{tpu_custom_call.1} parent=1 // pred_fallthru
      _
    %s23 = smul.u32 0, 2
    %s24 = smul.u32 0, 256
    %v25 = vlaneseq
    %v26 = vshrl.u32 %v25, 7
    %v27 = vstv %s23
    %v28 = vadd.s32 %v27, %v26
    %v29 = vcvt.s32.f32 %v28
    %v30 = vlaneseq
    %v31 = vand.u32 %v30, 127
    %v32 = vadd.s32 %v31, 128
    %v33 = vstv %s24
    %v34 = vadd.s32 %v33, %v31
    %v35 = vadd.s32 %v33, %v32
    %vm36 = vcmp.lt.s32.totalorder %v34, 0
    %v37 = vsub.s32 0, %v34
    %v38 = vsel %vm36, %v37, %v34
    %v39 = vshrl.u32 %v38, 5
    %v40 = vand.u32 %v38, 31
    %v41 = vsub.s32 0, %v40
    %v42 = vsel %vm36, %v41, %v40
    %vm43 = vcmp.lt.s32.totalorder %v35, 0
    %v44 = vsub.s32 0, %v35
    %v45 = vsel %vm43, %v44, %v35
    %v46 = vshrl.u32 %v45, 5
    %v47 = vand.u32 %v45, 31
    %v48 = vsub.s32 0, %v47
    %v49 = vsel %vm43, %v48, %v47
    %vm50 = vcmp.ne.s32.totalorder %v42, 0
    %vm51 = vcmp.ne.s32.totalorder %v49, 0
    %vm52 = vcmp.lt.s32.totalorder %v42, 0
    %vm53 = vcmp.lt.s32.totalorder %v49, 0
    %vm54 = vmand %vm52, %vm50
    %vm55 = vmand %vm53, %vm51
    %v56 = vadd.s32 %v42, 32
    %v57 = vadd.s32 %v49, 32
    %v58 = vsel %vm54, %v56, %v42
    %v59 = vsel %vm55, %v57, %v49
    %v60 = vcvt.s32.f32 %v58
    %v61 = vcvt.s32.f32 %v59
    %v62 = vmul.f32 %v60, -0.5756463
    %v63 = vmul.f32 %v61, -0.5756463
    %v64 = vmul.f32 %v62, 1.442695
    %v65 = vpow.pop %v64
    %v66 = vmul.f32 %v63, 1.442695
    %v67 = vpow.pop %v66
    %vm68 = vcmp.lt.s32.totalorder %v58, 0
    %v69 = vsub.s32 0, %v58
    %v70 = vsel %vm68, %v69, %v58
    %v71 = vshrl.u32 %v70, 1
    %v72 = vand.u32 %v70, 1
    %v73 = vsub.s32 0, %v72
    %v74 = vsel %vm68, %v73, %v72
    %vm75 = vcmp.lt.s32.totalorder %v59, 0
    %v76 = vsub.s32 0, %v59
    %v77 = vsel %vm75, %v76, %v59
    %v78 = vshrl.u32 %v77, 1
    %v79 = vand.u32 %v77, 1
    %v80 = vsub.s32 0, %v79
    %v81 = vsel %vm75, %v80, %v79
    %vm82 = vcmp.ne.s32.totalorder %v74, 0
    %vm83 = vcmp.ne.s32.totalorder %v81, 0
    %vm84 = vcmp.lt.s32.totalorder %v74, 0
    %vm85 = vcmp.lt.s32.totalorder %v81, 0
    %vm86 = vmand %vm84, %vm82
    %vm87 = vmand %vm85, %vm83
    %v88 = vadd.s32 %v74, 2
    %v89 = vadd.s32 %v81, 2
    %v90 = vsel %vm86, %v88, %v74
    %v91 = vsel %vm87, %v89, %v81
    %v92 = vcvt.s32.f32 %v90
    %v93 = vcvt.s32.f32 %v91
    %v94 = vmul.f32 %v92, 1.5707964
    %v95 = vmul.f32 %v93, 1.5707964
    %v96 = vmul.f32 %v29, %v65
    %v97 = vmul.f32 %v29, %v67
    %v98 = vadd.f32 %v96, %v94
    %v99 = vadd.f32 %v97, %v95
    %v100 = vand.u32 2147483647, %v98
    %vm101 = vcmp.le.f32.partialorder %v100, 0.7853982
    %vm102 = vcmp.lt.s32.totalorder %v98, 0
    %v103 = vand.u32 %v98, 2139095040
    %v104 = vshrl.u32 %v103, 23
    %v105 = vsub.s32 %v104, 127
    %v106 = vand.u32 2147483647, %v98
    %v107 = vand.u32 %v106, 8388607
    %v108 = vor.u32 %v107, 8388608
    %v109 = vsub.s32 0, %v108
    %v110 = vadd.s32 %v105, 1
    %vm111 = vcmp.gt.s32.totalorder %v110, 0
    %v112 = vsel %vm111, %v110, 0
    %v113 = vshrl.u32 %v112, 5
    %v114 = vand.u32 %v112, 31
    %v115 = vsub.s32 32, %v114
    %v116 = vshrl.u32 683565275, %v115
    %v117 = vshll.u32 683565275, %v114
    %v118 = vshrl.u32 2475754826, %v115
    %v119 = vor.u32 %v117, %v118
    %v120 = vshll.u32 2475754826, %v114
    %v121 = vshrl.u32 2131351028, %v115
    %v122 = vor.u32 %v120, %v121
    %v123 = vshll.u32 2131351028, %v114
    %v124 = vshrl.u32 2102212464, %v115
    %v125 = vor.u32 %v123, %v124
    %v126 = vshll.u32 2102212464, %v114
    %v127 = vshrl.u32 920167782, %v115
    %v128 = vor.u32 %v126, %v127
    %v129 = vshll.u32 920167782, %v114
    %v130 = vshrl.u32 1326507024, %v115
    %v131 = vor.u32 %v129, %v130
    %vm132 = vcmp.lt.s32.totalorder %v113, 1
    %vm133 = vcmp.lt.s32.totalorder %v113, 2
    %vm134 = vcmp.lt.s32.totalorder %v113, 3
    %vm135 = vcmp.lt.s32.totalorder %v113, 4
    %v136 = vsel %vm132, %v116, %v119
    %v137 = vsel %vm135, %v125, 2102212464
    %v138 = vsel %vm134, %v122, %v137
    %v139 = vsel %vm133, %v136, %v138
    %v140 = vsel %vm132, %v119, %v122
    %v141 = vsel %vm135, %v128, 920167782
    %v142 = vsel %vm134, %v125, %v141
    %v143 = vsel %vm133, %v140, %v142
    %v144 = vsel %vm132, %v122, %v125
    %v145 = vsel %vm135, %v131, 1326507024
    %v146 = vsel %vm134, %v128, %v145
    %v147 = vsel %vm133, %v144, %v146
    %v148 = vshll.u32 %v108, 8
    %v149 = vand.u32 %v148, 65535
    %v150 = vshrl.u32 %v148, 16
    %v151 = vand.u32 %v147, 65535
    %v152 = vshrl.u32 %v147, 16
    %v153 = vmul.u32 %v149, %v151
    %v154 = vmul.u32 %v149, %v152
    %v155 = vmul.u32 %v150, %v151
    %v156 = vmul.u32 %v150, %v152
    %v157 = vshll.u32 %v154, 16
    %v158 = vshrl.u32 %v154, 16
    %v159 = vshll.u32 %v155, 16
    %v160 = vshrl.u32 %v155, 16
    %vm161 = vc.u32 %v153, %v157
    %v162 = vsel %vm161, 1, 0
    %v163 = vadd.s32 %v153, %v157
    %v164 = vadd.s32 %v156, %v162
    %vm165 = vc.u32 %v163, %v159
    %v166 = vsel %vm165, 1, 0
    %v167 = vadd.s32 %v163, %v159
    %v168 = vadd.s32 %v164, %v166
    %v169 = vadd.s32 %v168, %v158
    %v170 = vadd.s32 %v169, %v160
    %v171 = vand.u32 %v148, 65535
    %v172 = vshrl.u32 %v148, 16
    %v173 = vand.u32 %v143, 65535
    %v174 = vshrl.u32 %v143, 16
    %v175 = vmul.u32 %v171, %v173
    %v176 = vmul.u32 %v171, %v174
    %v177 = vmul.u32 %v172, %v173
    %v178 = vmul.u32 %v172, %v174
    %v179 = vshll.u32 %v176, 16
    %v180 = vshrl.u32 %v176, 16
    %v181 = vshll.u32 %v177, 16
    %v182 = vshrl.u32 %v177, 16
    %vm183 = vc.u32 %v175, %v179
    %v184 = vsel %vm183, 1, 0
    %v185 = vadd.s32 %v175, %v179
    %v186 = vadd.s32 %v178, %v184
    %vm187 = vc.u32 %v185, %v181
    %v188 = vsel %vm187, 1, 0
    %v189 = vadd.s32 %v185, %v181
    %v190 = vadd.s32 %v186, %v188
    %v191 = vadd.s32 %v190, %v180
    %v192 = vadd.s32 %v191, %v182
    %v193 = vmul.u32 %v148, %v139
    %v194 = vadd.s32 %v170, %v189
    %vm195 = vc.u32 %v170, %v189
    %v196 = vadd.s32 %v192, 1
    %v197 = vsel %vm195, %v196, %v192
    %v198 = vadd.s32 %v193, %v197
    %v199 = vadd.s32 %v198, 536870912
    %v200 = vshrl.u32 %v199, 30
    %v201 = vshll.u32 %v200, 30
    %v202 = vsub.s32 %v198, %v201
    %vm203 = vcmp.lt.s32.totalorder %v202, 0
    %v204 = vsub.s32 0, %v202
    %v205 = vsel %vm203, %v204, %v202
    %v206 = vclz %v205
    %v207 = vsub.s32 %v206, 2
    %vm208 = vcmp.gt.s32.totalorder 0, %v207
    %v209 = vsel %vm208, 0, %v207
    %v210 = vsub.s32 32, %v209
    %v211 = vshll.u32 %v202, %v209
    %v212 = vshrl.u32 %v194, %v210
    %v213 = vor.u32 %v211, %v212
    %v214 = vsub.s32 4294967266, %v209
    %v215 = vadd.s32 %v214, 127
    %v216 = vshll.u32 %v215, 23
    %v217 = vor.u32 4788187, %v216
    %v218 = vand.u32 2147483647, %v217
    %v220 = vcvt.s32.f32 %v213
    %v221 = vmul.f32 %v220, %v218
    %v222 = vxor.u32 %v221, 2147483648
    %v223 = vsel %vm102, %v222, %v221
    %v224 = vsub.s32 4, %v200
    %v225 = vsel %vm102, %v224, %v200
    %v226 = vsel %vm101, %v98, %v223
    %v227 = vsel %vm101, 0, %v225
    %v228 = vmul.f32 %v226, %v226
    %v229 = vmul.f32 %v228, -0.001358992
    %v230 = vadd.f32 %v229, 0.041655596
    %v231 = vmul.f32 %v228, %v230
    %v232 = vadd.f32 %v231, -0.4999988
    %v233 = vmul.f32 %v228, %v232
    %v234 = vadd.f32 1.0, %v233
    %v235 = vmul.f32 %v226, %v226
    %v236 = vmul.f32 %v235, -0.00019511016
    %v237 = vadd.f32 %v236, 0.008332121
    %v238 = vmul.f32 %v235, %v237
    %v239 = vadd.f32 %v238, -0.16666654
    %v240 = vmul.f32 %v235, %v239
    %v241 = vadd.f32 %v240, 1.0
    %v242 = vmul.f32 %v241, %v226
    %vm243 = vweird.f32 %v98
    %v244 = vadd.s32 %v227, 3
    %v245 = vand.u32 %v244, 3
    %vm246 = vcmp.lt.s32.totalorder %v245, 2
    %vm247 = vcmp.eq.s32.totalorder %v245, 0
    %v248 = vxor.u32 %v242, 2147483648
    %v249 = vsel %vm247, %v234, %v248
    %vm250 = vcmp.eq.s32.totalorder %v245, 2
    %v251 = vxor.u32 %v234, 2147483648
    %v252 = vsel %vm250, %v251, %v242
    %v253 = vsel %vm246, %v249, %v252
    %v254 = vsel %vm243, nan, %v253
    %v255 = vand.u32 2147483647, %v99
    %vm256 = vcmp.le.f32.partialorder %v255, 0.7853982
    %vm257 = vcmp.lt.s32.totalorder %v99, 0
    %v258 = vand.u32 %v99, 2139095040
    %v259 = vshrl.u32 %v258, 23
    %v260 = vsub.s32 %v259, 127
    %v261 = vand.u32 2147483647, %v99
    %v262 = vand.u32 %v261, 8388607
    %v263 = vor.u32 %v262, 8388608
    %v264 = vsub.s32 0, %v263
    %v265 = vadd.s32 %v260, 1
    %vm266 = vcmp.gt.s32.totalorder %v265, 0
    %v267 = vsel %vm266, %v265, 0
    %v268 = vshrl.u32 %v267, 5
    %v269 = vand.u32 %v267, 31
    %v270 = vsub.s32 32, %v269
    %v271 = vshrl.u32 683565275, %v270
    %v272 = vshll.u32 683565275, %v269
    %v273 = vshrl.u32 2475754826, %v270
    %v274 = vor.u32 %v272, %v273
    %v275 = vshll.u32 2475754826, %v269
    %v276 = vshrl.u32 2131351028, %v270
    %v277 = vor.u32 %v275, %v276
    %v278 = vshll.u32 2131351028, %v269
    %v279 = vshrl.u32 2102212464, %v270
    %v280 = vor.u32 %v278, %v279
    %v281 = vshll.u32 2102212464, %v269
    %v282 = vshrl.u32 920167782, %v270
    %v283 = vor.u32 %v281, %v282
    %v284 = vshll.u32 920167782, %v269
    %v285 = vshrl.u32 1326507024, %v270
    %v286 = vor.u32 %v284, %v285
    %vm287 = vcmp.lt.s32.totalorder %v268, 1
    %vm288 = vcmp.lt.s32.totalorder %v268, 2
    %vm289 = vcmp.lt.s32.totalorder %v268, 3
    %vm290 = vcmp.lt.s32.totalorder %v268, 4
    %v291 = vsel %vm287, %v271, %v274
    %v292 = vsel %vm290, %v280, 2102212464
    %v293 = vsel %vm289, %v277, %v292
    %v294 = vsel %vm288, %v291, %v293
    %v295 = vsel %vm287, %v274, %v277
    %v296 = vsel %vm290, %v283, 920167782
    %v297 = vsel %vm289, %v280, %v296
    %v298 = vsel %vm288, %v295, %v297
    %v299 = vsel %vm287, %v277, %v280
    %v300 = vsel %vm290, %v286, 1326507024
    %v301 = vsel %vm289, %v283, %v300
    %v302 = vsel %vm288, %v299, %v301
    %v303 = vshll.u32 %v263, 8
    %v304 = vand.u32 %v303, 65535
    %v305 = vshrl.u32 %v303, 16
    %v306 = vand.u32 %v302, 65535
    %v307 = vshrl.u32 %v302, 16
    %v308 = vmul.u32 %v304, %v306
    %v309 = vmul.u32 %v304, %v307
    %v310 = vmul.u32 %v305, %v306
    %v311 = vmul.u32 %v305, %v307
    %v312 = vshll.u32 %v309, 16
    %v313 = vshrl.u32 %v309, 16
    %v314 = vshll.u32 %v310, 16
    %v315 = vshrl.u32 %v310, 16
    %vm316 = vc.u32 %v308, %v312
    %v317 = vsel %vm316, 1, 0
    %v318 = vadd.s32 %v308, %v312
    %v319 = vadd.s32 %v311, %v317
    %vm320 = vc.u32 %v318, %v314
    %v321 = vsel %vm320, 1, 0
    %v322 = vadd.s32 %v318, %v314
    %v323 = vadd.s32 %v319, %v321
    %v324 = vadd.s32 %v323, %v313
    %v325 = vadd.s32 %v324, %v315
    %v326 = vand.u32 %v303, 65535
    %v327 = vshrl.u32 %v303, 16
    %v328 = vand.u32 %v298, 65535
    %v329 = vshrl.u32 %v298, 16
    %v330 = vmul.u32 %v326, %v328
    %v331 = vmul.u32 %v326, %v329
    %v332 = vmul.u32 %v327, %v328
    %v333 = vmul.u32 %v327, %v329
    %v334 = vshll.u32 %v331, 16
    %v335 = vshrl.u32 %v331, 16
    %v336 = vshll.u32 %v332, 16
    %v337 = vshrl.u32 %v332, 16
    %vm338 = vc.u32 %v330, %v334
    %v339 = vsel %vm338, 1, 0
    %v340 = vadd.s32 %v330, %v334
    %v341 = vadd.s32 %v333, %v339
    %vm342 = vc.u32 %v340, %v336
    %v343 = vsel %vm342, 1, 0
    %v344 = vadd.s32 %v340, %v336
    %v345 = vadd.s32 %v341, %v343
    %v346 = vadd.s32 %v345, %v335
    %v347 = vadd.s32 %v346, %v337
    %v348 = vmul.u32 %v303, %v294
    %v349 = vadd.s32 %v325, %v344
    %vm350 = vc.u32 %v325, %v344
    %v351 = vadd.s32 %v347, 1
    %v352 = vsel %vm350, %v351, %v347
    %v353 = vadd.s32 %v348, %v352
    %v354 = vadd.s32 %v353, 536870912
    %v355 = vshrl.u32 %v354, 30
    %v356 = vshll.u32 %v355, 30
    %v357 = vsub.s32 %v353, %v356
    %vm358 = vcmp.lt.s32.totalorder %v357, 0
    %v359 = vsub.s32 0, %v357
    %v360 = vsel %vm358, %v359, %v357
    %v361 = vclz %v360
    %v362 = vsub.s32 %v361, 2
    %vm363 = vcmp.gt.s32.totalorder 0, %v362
    %v364 = vsel %vm363, 0, %v362
    %v365 = vsub.s32 32, %v364
    %v366 = vshll.u32 %v357, %v364
    %v367 = vshrl.u32 %v349, %v365
    %v368 = vor.u32 %v366, %v367
    %v369 = vsub.s32 4294967266, %v364
    %v370 = vadd.s32 %v369, 127
    %v371 = vshll.u32 %v370, 23
    %v372 = vor.u32 4788187, %v371
    %v373 = vand.u32 2147483647, %v372
    %v375 = vcvt.s32.f32 %v368
    %v376 = vmul.f32 %v375, %v373
    %v377 = vxor.u32 %v376, 2147483648
    %v378 = vsel %vm257, %v377, %v376
    %v379 = vsub.s32 4, %v355
    %v380 = vsel %vm257, %v379, %v355
    %v381 = vsel %vm256, %v99, %v378
    %v382 = vsel %vm256, 0, %v380
    %v383 = vmul.f32 %v381, %v381
    %v384 = vmul.f32 %v383, -0.001358992
    %v385 = vadd.f32 %v384, 0.041655596
    %v386 = vmul.f32 %v383, %v385
    %v387 = vadd.f32 %v386, -0.4999988
    %v388 = vmul.f32 %v383, %v387
    %v389 = vadd.f32 1.0, %v388
    %v390 = vmul.f32 %v381, %v381
    %v391 = vmul.f32 %v390, -0.00019511016
    %v392 = vadd.f32 %v391, 0.008332121
    %v393 = vmul.f32 %v390, %v392
    %v394 = vadd.f32 %v393, -0.16666654
    %v395 = vmul.f32 %v390, %v394
    %v396 = vadd.f32 %v395, 1.0
    %v397 = vmul.f32 %v396, %v381
    %vm398 = vweird.f32 %v99
    %v399 = vadd.s32 %v382, 3
    %v400 = vand.u32 %v399, 3
    %vm401 = vcmp.lt.s32.totalorder %v400, 2
    %vm402 = vcmp.eq.s32.totalorder %v400, 0
    %v403 = vxor.u32 %v397, 2147483648
    %v404 = vsel %vm402, %v389, %v403
    %vm405 = vcmp.eq.s32.totalorder %v400, 2
    %v406 = vxor.u32 %v389, 2147483648
    %v407 = vsel %vm405, %v406, %v397
    %v408 = vsel %vm401, %v404, %v407
    %v409 = vsel %vm398, nan, %v408
    %v410 = vld [vmem:[#allocation2] sm:$0xf]
    %v413 = vrot.slane %v409, 6
    %vm414 = vcmask 1041408
    %v415 = vsel %vm414, %v254, %v413
    %v417 = vadd.f32 %v410, %v415
    %418 = vst [vmem:[#allocation5] sm:$0xf] %v417
    // Predicated region
    $region10: #{tpu_custom_call.1} parent=1 // pred_check
      _
    $region11: #{tpu_custom_call.1} parent=1 // pred_check_branch
      %420 = sbr.rel (0) target = $region13
    $region12: #{tpu_custom_call.1} parent=1 // pred_region
      %422 = vsyncadd [#allocation4], 0
      %s424 = sshll.u32 [#allocation5], 4
      %s425 = int_to_ptr.vmem [resolvable:$true] %s424
      %s426 = sshll.u32 %s1, 4
      %s427 = int_to_ptr.hbm [resolvable:$true] %s426
      %429 = dma.vmem_to_hbm [thread:$0]  %s425, 64, %s427, [#allocation4]
    $region13: #{tpu_custom_call.1} parent=1 // pred_fallthru
      _
    // Predicated region
    $region14: #{tpu_custom_call.1} parent=1 // pred_check
      _
    $region15: #{tpu_custom_call.1} parent=1 // pred_check_branch
      %431 = sbr.rel (0) target = $region17
    $region16: #{tpu_custom_call.1} parent=1 // pred_region
      %433 = dma.done [#allocation4], 64
    $region17: #{tpu_custom_call.1} parent=1 // pred_fallthru
      _
    %434 = vsyncpa [#allocation3], 1
    %435 = vsyncpa [#allocation4], 1

</llo_original>
